<compile_context>
chip_gen: v7x
topology: tpu7x:2x2x1
jax: 0.10.0
libtpu: 0.0.40
codegen_flags: <defaults>
</compile_context>

<pallas_src>
import jax
import jax.numpy as jnp
from jax.experimental import pallas as pl
from jax.experimental.pallas import tpu as pltpu


def _scalar_embedding_kernel(x_ref, w_ref, o_ref):
    """x_ref: (TB, N, 1) f32, w_ref: (N, D) f32 (rows 1..N of the table),
    o_ref: (TB, N, D)."""
    x = x_ref[...]                                           # (TB, N, 1)
    w = w_ref[...]                                           # (N, D), grid-constant
    x_clean = jnp.where(jnp.isnan(x), jnp.zeros_like(x), x)  # x_[mask] = 0
    # out[b, n, d] = x_clean[b, n] * weight[n + 1, d]
    #  - masked (NaN) positions are exactly 0, matching weight[0] * 0
    o_ref[...] = (x_clean * w[None, :, :]).astype(o_ref.dtype)


def _pick_block_b(B, N, D, out_itemsize, x_itemsize, w_itemsize,
                  vmem_budget_bytes=12 * 1024 * 1024):
    """Largest batch tile whose double-buffered blocks fit the most
    conservative scoped-VMEM default (v5e: 16 MiB), with >= 2 grid steps so
    v7x's two TensorCores both get work."""
    per_row = 2 * (N * D * out_itemsize + N * x_itemsize)   # double-buffered out + x
    fixed = 2 * N * D * w_itemsize                          # weight rows (both buffers)
    max_rows = max(1, (vmem_budget_bytes - fixed) // per_row)
    block_b = min(B, int(max_rows))
    if B > 1:
        block_b = min(block_b, -(-B // 2))                  # keep grid >= 2 steps
    if block_b >= 8:
        block_b = (block_b // 8) * 8                        # sublane-aligned tiles
    return max(1, block_b)


def scalar_embedding(x, weight, *, block_b=None, out_dtype=None):
    """ScalarEmbedding forward.

    x:      (B, N) float32, NaN marks "missing" scalar config
    weight: (V, D) float32 embedding table, V = config_vocab_size + 1
    returns (B, N, D) in `out_dtype` (default: weight.dtype)
    """
    B, N = x.shape
    V, D = weight.shape
    if N + 1 > V:
        # PyTorch nn.Embedding would raise an out-of-range error here.
        raise ValueError(f"seq length {N} requires vocab >= {N + 1}, got {V}")
    out_dtype = weight.dtype if out_dtype is None else jnp.dtype(out_dtype)

    # Only the rows actually used (token ids 1..N); weight[0] never contributes.
    w_rows = weight[1:N + 1]                                 # (N, D)

    if block_b is None:
        block_b = _pick_block_b(B, N, D,
                                jnp.dtype(out_dtype).itemsize,
                                x.dtype.itemsize,
                                weight.dtype.itemsize)
    block_b = max(1, min(int(block_b), B))

    n_blocks = pl.cdiv(B, block_b)
    B_pad = n_blocks * block_b
    x_in = x if B_pad == B else jnp.pad(x, ((0, B_pad - B), (0, 0)))
    # (B, N, 1): N on sublanes -> broadcast along D is a cheap lane-broadcast.
    x_in = x_in.reshape(B_pad, N, 1)

    out = pl.pallas_call(
        _scalar_embedding_kernel,
        out_shape=jax.ShapeDtypeStruct((B_pad, N, D), out_dtype),
        grid=(n_blocks,),
        in_specs=[
            # x: tiled over batch, full (N, 1) in one block.
            pl.BlockSpec((block_b, N, 1), lambda i: (i, 0, 0)),
            # weight rows: constant index_map -> fetched once, stays resident.
            pl.BlockSpec((N, D), lambda i: (0, 0)),
        ],
        # Output tiled over batch; (N, D) last two dims -> lane-dense stores
        # when D is a multiple of 128.
        out_specs=pl.BlockSpec((block_b, N, D), lambda i: (i, 0, 0)),
        compiler_params=pltpu.CompilerParams(
            dimension_semantics=("parallel",),   # batch tiles are independent
        ),
        cost_estimate=pl.CostEstimate(
            flops=B_pad * N * D,
            transcendentals=0,
            bytes_accessed=(B_pad * N * x.dtype.itemsize
                            + N * D * weight.dtype.itemsize
                            + B_pad * N * D * jnp.dtype(out_dtype).itemsize),
        ),
    )(x_in, w_rows)

    return out if B_pad == B else out[:B]


if __name__ == "__main__":
    # Small shapes consistent with the module: batch=16, N (scalar configs)=8,
    # config_vocab_size=16 (>= N), dim=128 (lane-dense hidden size).
    B, N = 16, 8
    config_vocab_size, dim = 16, 128
    V = config_vocab_size + 1

    key = jax.random.PRNGKey(0)
    k_w, k_x = jax.random.split(key)

    # nn.init.normal_(weight, std=0.02)
    weight = (0.02 * jax.random.normal(k_w, (V, dim))).astype(jnp.float32)

    x = jax.random.normal(k_x, (B, N)).astype(jnp.float32)
    # Inject NaNs to exercise the mask path (missing scalar configs).
    x = x.at[0, 2].set(jnp.nan)
    x = x.at[3, 5].set(jnp.nan)
    x = x.at[7, 0].set(jnp.nan)

    out = scalar_embedding(x, weight)     # auto block_b -> 8, grid=(2,)
    jax.block_until_ready(out)

    # Pure-JAX reference with the full original semantics (token gather).
    mask = jnp.isnan(x)
    x_clean = jnp.where(mask, 0.0, x)
    token = jnp.where(mask, 0, jnp.arange(1, N + 1, dtype=jnp.int32)[None, :])
    ref = weight[token] * x_clean[..., None]

    assert out.shape == (B, N, dim)
    assert bool(jnp.all(jnp.isfinite(out)))
    assert jnp.allclose(out, ref, atol=1e-6, rtol=1e-6)

    print("KERNEL_OK")
</pallas_src>

<mosaic_0001>
module attributes {stable_mosaic.version = 11 : i64} {
  func.func @_scalar_embedding_kernel(%arg0: i32, %arg1: memref<8x8x1xf32, #tpu.memory_space<vmem>>, %arg2: memref<8x128xf32, #tpu.memory_space<vmem>>, %arg3: memref<8x8x128xf32, #tpu.memory_space<vmem>>) attributes {dimension_semantics = [#tpu.dimension_semantics<parallel>], iteration_bounds = array<i64: 2>, scalar_prefetch = 0 : i64, scratch_operands = 0 : i64, tpu.core_type = #tpu.core_type<tc>, window_params = [{transform_indices = @transform_0, window_bounds = array<i64: 8, 8, 1>}, {pipeline_mode = #tpu.pipeline_mode<synchronous>, transform_indices = @transform_1, window_bounds = array<i64: 8, 128>}, {transform_indices = @transform_2, window_bounds = array<i64: 8, 8, 128>}]} {
    %c0 = arith.constant 0 : index
    %c0_0 = arith.constant 0 : index
    %c0_1 = arith.constant 0 : index
    %0 = vector.load %arg1[%c0, %c0_0, %c0_1] : memref<8x8x1xf32, #tpu.memory_space<vmem>>, vector<8x8x1xf32>
    %c0_2 = arith.constant 0 : index
    %c0_3 = arith.constant 0 : index
    %1 = vector.load %arg2[%c0_2, %c0_3] : memref<8x128xf32, #tpu.memory_space<vmem>>, vector<8x128xf32>
    %2 = arith.cmpf one, %0, %0 : vector<8x8x1xf32>
    %cst = arith.constant 0.000000e+00 : f32
    %3 = vector.broadcast %cst : f32 to vector<8x8x1xf32>
    %4 = arith.select %2, %3, %0 : vector<8x8x1xi1>, vector<8x8x1xf32>
    %5 = vector.shape_cast %1 : vector<8x128xf32> to vector<1x8x128xf32>
    %6 = vector.broadcast %4 : vector<8x8x1xf32> to vector<8x8x128xf32>
    %7 = vector.broadcast %5 : vector<1x8x128xf32> to vector<8x8x128xf32>
    %8 = arith.mulf %6, %7 : vector<8x8x128xf32>
    %c0_4 = arith.constant 0 : index
    %c0_5 = arith.constant 0 : index
    %c0_6 = arith.constant 0 : index
    %9 = vector.load %arg3[%c0_4, %c0_5, %c0_6] : memref<8x8x128xf32, #tpu.memory_space<vmem>>, vector<8x8x128xf32>
    tpu.vector_store %arg3[%c0_4, %c0_5, %c0_6], %8 {strides = array<i32>} : memref<8x8x128xf32, #tpu.memory_space<vmem>>, vector<8x8x128xf32>,
    return
  }
  func.func @transform_0(%arg0: i32) -> (i32, i32, i32) {
    %c0_i32 = arith.constant 0 : i32
    %c0_i32_0 = arith.constant 0 : i32
    %c0_i32_1 = arith.constant 0 : i32
    return %arg0, %c0_i32, %c0_i32_0 : i32, i32, i32
  }
  func.func @transform_1(%arg0: i32) -> (i32, i32) {
    %c0_i32 = arith.constant 0 : i32
    %c0_i32_0 = arith.constant 0 : i32
    %c0_i32_1 = arith.constant 0 : i32
    return %c0_i32, %c0_i32_0 : i32, i32
  }
  func.func @transform_2(%arg0: i32) -> (i32, i32, i32) {
    %c0_i32 = arith.constant 0 : i32
    %c0_i32_0 = arith.constant 0 : i32
    %c0_i32_1 = arith.constant 0 : i32
    return %arg0, %c0_i32, %c0_i32_0 : i32, i32, i32
  }
}

</mosaic_0001>

<llo_original>
// kernel: tpu_custom_call.1
$region0: #{tpu_custom_call.1}
  #allocation0 [shape = 'u32[]', space=smem, size = 0x4, offset = 0x4, fixed_abs, tag = 'smem constant byte address 0x4 - core index']
  #allocation1 [shape = 'u32[144,128]{1,0:T(1,128)}', space=vmem, size = 0x12000, scoped, tag = 'internal scratch']
  %s0 = inlined_call_operand.vmem [shape: f32[16,8,1], index: 0, kind: input, shape index: {}]
  %s1 = inlined_call_operand.vmem [shape: f32[8,128], index: 1, kind: input, shape index: {}]
  %s2 = inlined_call_operand.hbm [shape: f32[16,8,128], index: 2, kind: output, shape index: {}]
  %s3 = sld [smem:[#allocation0]]
  $region41: #{tpu_custom_call.1} parent=0
    _
  %s5 = ssub.s32 1, %s3
  %s6 = scalar_select 0, %s5, %s3
  $region1: #{tpu_custom_call.1} parent=0
    #allocation2 [shape = 'u8[65536]{0}', space=vmem, size = 0x10000, scoped, tag = 'output window, operand 0']
    #allocation3 [shape = 's32[2]{0}', space=sflag, size = 0x8, scoped, tag = 'scoped memory for tpu_custom_call.1']
    %7 = vsyncpa [#allocation3], 0
    %s8 = scalar_lea.sflag [#allocation3], 1
    %9 = vsyncpa %s8, 0
    loop: start=0, step=1, limit=4
    $region2: #{tpu_custom_call.1} parent=1 // loop_pre_header
      _
    $region3: #{tpu_custom_call.1} parent=1 // loop_header
      %s11 = sphi 0, %s15
      %p12 = scmp.ge.s32.totalorder %s11, 4
      %s21 = sphi 0, %s23
      %s24 = sphi 0, %s21
      %s25 = sphi 0, %s24
      %s41 = sphi 0, %s25
      %s45 = sphi 0, %s45
      %s47 = sphi 0, %s45
      %s48 = sphi 0, %s47
      %s62 = sphi 0, %s48
      %s68 = sphi 0, %s70
      %s71 = sphi 0, %s68
      %s72 = sphi 0, %s71
      %s88 = sphi 0, %s72
    $region4: #{tpu_custom_call.1} parent=1 // loop_header_branch
      %14 = sbr.rel (%p12) target = $region8
    $region5: #{tpu_custom_call.1} parent=1 // loop_body
      %s16 = ssub.s32 %s11, 1
      %s17 = ssub.s32 %s11, 2
      %s18 = sadd.s32 %s11, 1
      %s19 = ssub.s32 %s11, %s18
      %p20 = scmp.eq.s32.totalorder %s19, 0
      %s22 = sadd.s32 %s21, 1
      %s23 = scalar_select %p20, %s21, %s22
      %p26 = pneg %p20
      %p27 = scmp.eq.s32.totalorder %s11, 1
      %p28 = por %p26, %p27
      %p29 = scmp.ne.s32.totalorder %s21, %s24
      %p30 = scmp.eq.s32.totalorder %s11, 0
      %p31 = por %p29, %p30
      %p32 = scmp.ne.s32.totalorder %s21, %s24
      %p33 = scmp.eq.s32.totalorder %s16, 1
      %p34 = por %p32, %p33
      %p35 = scmp.ne.s32.totalorder %s24, %s25
      %p36 = scmp.eq.s32.totalorder %s16, 0
      %p37 = por %p35, %p36
      %p38 = scmp.ne.s32.totalorder %s24, %s25
      %p39 = scmp.eq.s32.totalorder %s17, 1
      %p40 = por %p38, %p39
      %p42 = scmp.ne.s32.totalorder %s25, %s41
      %p43 = scmp.eq.s32.totalorder %s17, 0
      %p44 = por %p42, %p43
      %s46 = sadd.s32 %s45, 1
      %p49 = scmp.eq.s32.totalorder %s11, 1
      %p50 = scmp.ne.s32.totalorder %s45, %s47
      %p51 = scmp.eq.s32.totalorder %s11, 0
      %p52 = por %p50, %p51
      %p53 = scmp.ne.s32.totalorder %s45, %s47
      %p54 = scmp.eq.s32.totalorder %s16, 1
      %p55 = por %p53, %p54
      %p56 = scmp.ne.s32.totalorder %s47, %s48
      %p57 = scmp.eq.s32.totalorder %s16, 0
      %p58 = por %p56, %p57
      %p59 = scmp.ne.s32.totalorder %s47, %s48
      %p60 = scmp.eq.s32.totalorder %s17, 1
      %p61 = por %p59, %p60
      %p63 = scmp.ne.s32.totalorder %s48, %s62
      %p64 = scmp.eq.s32.totalorder %s17, 0
      %p65 = por %p63, %p64
      %s66 = ssub.s32 %s11, %s18
      %p67 = scmp.eq.s32.totalorder %s66, 0
      %s69 = sadd.s32 %s68, 1
      %s70 = scalar_select %p67, %s68, %s69
      %p73 = pneg %p67
      %p74 = scmp.eq.s32.totalorder %s11, 1
      %p75 = por %p73, %p74
      %p76 = scmp.ne.s32.totalorder %s68, %s71
      %p77 = scmp.eq.s32.totalorder %s11, 0
      %p78 = por %p76, %p77
      %p79 = scmp.ne.s32.totalorder %s68, %s71
      %p80 = scmp.eq.s32.totalorder %s16, 1
      %p81 = por %p79, %p80
      %p82 = scmp.ne.s32.totalorder %s71, %s72
      %p83 = scmp.eq.s32.totalorder %s16, 0
      %p84 = por %p82, %p83
      %p85 = scmp.ne.s32.totalorder %s71, %s72
      %p86 = scmp.eq.s32.totalorder %s17, 1
      %p87 = por %p85, %p86
      %p89 = scmp.ne.s32.totalorder %s72, %s88
      %p90 = scmp.eq.s32.totalorder %s17, 0
      %p91 = por %p89, %p90
      %p92 = scmp.le.s32.totalorder 1, %s11
      %p93 = scmp.lt.s32.totalorder %s11, 3
      %p94 = pnand %p92, %p93
      %p95 = pneg %p94
      // Predicated region
      $region9: #{tpu_custom_call.1} parent=5 // pred_check
        _
      $region10: #{tpu_custom_call.1} parent=5 // pred_check_branch
        %97 = sbr.rel (%p94) target = $region12
      $region11: #{tpu_custom_call.1} parent=5 // pred_region
        %s98 = ssub.s32 %s11, 1
        // Predicated region
        $region13: #{tpu_custom_call.1} parent=11 // pred_check
          %p99 = pneg %p58
        $region14: #{tpu_custom_call.1} parent=11 // pred_check_branch
          %101 = sbr.rel (%p99) target = $region16
        $region15: #{tpu_custom_call.1} parent=11 // pred_region
          _
        $region16: #{tpu_custom_call.1} parent=11 // pred_fallthru
          _
      $region12: #{tpu_custom_call.1} parent=5 // pred_fallthru
        _
      %p102 = scmp.lt.s32.totalorder %s11, 2
      // Predicated region
      $region17: #{tpu_custom_call.1} parent=5 // pred_check
        %p103 = pneg %p102
      $region18: #{tpu_custom_call.1} parent=5 // pred_check_branch
        %105 = sbr.rel (%p103) target = $region20
      $region19: #{tpu_custom_call.1} parent=5 // pred_region
        // Predicated region
        $region21: #{tpu_custom_call.1} parent=19 // pred_check
          %p106 = pneg %p31
        $region22: #{tpu_custom_call.1} parent=19 // pred_check_branch
          %108 = sbr.rel (%p106) target = $region24
        $region23: #{tpu_custom_call.1} parent=19 // pred_region
          %s109 = smul.u32 8, %s11
          %p110 = scmp.lt.s32.totalorder %s109, 15
          %s111 = scalar_select %p110, %s109, 15
          %s112 = smul.addr %s111, 8
          %s113 = scalar_lea.vmem %s0, %s112
          %s114 = smul.u32 8, %s11
        $region24: #{tpu_custom_call.1} parent=19 // pred_fallthru
          _
      $region20: #{tpu_custom_call.1} parent=5 // pred_fallthru
        _
      %p115 = scmp.le.s32.totalorder 1, %s11
      %p116 = scmp.lt.s32.totalorder %s11, 3
      %p117 = pnand %p115, %p116
      %p118 = pneg %p117
      // Predicated region
      $region25: #{tpu_custom_call.1} parent=5 // pred_check
        _
      $region26: #{tpu_custom_call.1} parent=5 // pred_check_branch
        %120 = sbr.rel (%p117) target = $region28
      $region27: #{tpu_custom_call.1} parent=5 // pred_region
        %s121 = ssub.s32 %s11, 1
        %s122 = smul.u32 8, %s16
        %p123 = scmp.lt.s32.totalorder %s122, 15
        %s124 = scalar_select %p123, %s122, 15
        %s125 = smul.addr %s124, 8
        %s126 = scalar_lea.vmem %s0, %s125
        %p127 = pneg %p37
        %p128 = pneg %p34
        %p129 = pneg %p58
        %p130 = pneg %p55
        %p131 = pneg %p84
        %p132 = pneg %p81
        %s133 = sand.u32 %s71, 1
        %s134 = scalar_lea.sflag [#allocation3], %s133
        %s135 = sand.u32 %s71, 1
        %s136 = smul.addr %s135, 64
        %s137 = scalar_lea.vmem [#allocation2], %s136
        %s138 = smul.u32 8, %s16
        %p139 = scmp.lt.s32.totalorder %s138, 15
        %s140 = scalar_select %p139, %s138, 15
        %s141 = smul.addr %s140, 8
        %s142 = scalar_lea.vmem %s0, %s141
        %s143 = smul.u32 8, %s16
        %s144 = smul.u32 8, %s16
        %v145 = vld [vmem:[%s142] sm:$0xff]
        %v146 = vld [vmem:[%s142 + $0x8] sm:$0xff]
        %v147 = vld [vmem:[%s142 + $0x10] sm:$0xff]
        %v148 = vld [vmem:[%s142 + $0x18] sm:$0xff]
        %v149 = vld [vmem:[%s142 + $0x20] sm:$0xff]
        %v150 = vld [vmem:[%s142 + $0x28] sm:$0xff]
        %v151 = vld [vmem:[%s142 + $0x30] sm:$0xff]
        %v152 = vld [vmem:[%s142 + $0x38] sm:$0xff]
        %v153 = vld [vmem:[%s1] sm:$0xff]
        %vm154 = vcmp.ne.f32.partialorder %v145, %v145
        %vm155 = vcmp.ne.f32.partialorder %v146, %v146
        %vm156 = vcmp.ne.f32.partialorder %v147, %v147
        %vm157 = vcmp.ne.f32.partialorder %v148, %v148
        %vm158 = vcmp.ne.f32.partialorder %v149, %v149
        %vm159 = vcmp.ne.f32.partialorder %v150, %v150
        %vm160 = vcmp.ne.f32.partialorder %v151, %v151
        %vm161 = vcmp.ne.f32.partialorder %v152, %v152
        %v162 = vsel %vm154, 0.0, %v145
        %v163 = vsel %vm155, 0.0, %v146
        %v164 = vsel %vm156, 0.0, %v147
        %v165 = vsel %vm157, 0.0, %v148
        %v166 = vsel %vm158, 0.0, %v149
        %v167 = vsel %vm159, 0.0, %v150
        %v168 = vsel %vm160, 0.0, %v151
        %v169 = vsel %vm161, 0.0, %v152
        %171 = vset.pattern.permute.xlu0 0
        %172 = vperm.xlu0 %171, %v162
        %v173 = vpop.permute.xlu0 %172
        %176 = vset.pattern.permute.xlu0 0
        %177 = vperm.xlu0 %176, %v163
        %v178 = vpop.permute.xlu0 %177
        %181 = vset.pattern.permute.xlu0 0
        %182 = vperm.xlu0 %181, %v164
        %v183 = vpop.permute.xlu0 %182
        %186 = vset.pattern.permute.xlu0 0
        %187 = vperm.xlu0 %186, %v165
        %v188 = vpop.permute.xlu0 %187
        %191 = vset.pattern.permute.xlu0 0
        %192 = vperm.xlu0 %191, %v166
        %v193 = vpop.permute.xlu0 %192
        %196 = vset.pattern.permute.xlu0 0
        %197 = vperm.xlu0 %196, %v167
        %v198 = vpop.permute.xlu0 %197
        %201 = vset.pattern.permute.xlu0 0
        %202 = vperm.xlu0 %201, %v168
        %v203 = vpop.permute.xlu0 %202
        %206 = vset.pattern.permute.xlu0 0
        %207 = vperm.xlu0 %206, %v169
        %v208 = vpop.permute.xlu0 %207
        %v210 = vmul.f32 %v173, %v153
        %v211 = vmul.f32 %v178, %v153
        %v212 = vmul.f32 %v183, %v153
        %v213 = vmul.f32 %v188, %v153
        %v214 = vmul.f32 %v193, %v153
        %v215 = vmul.f32 %v198, %v153
        %v216 = vmul.f32 %v203, %v153
        %v217 = vmul.f32 %v208, %v153
        %218 = vst [vmem:[%s137] sm:$0xff] %v210
        %219 = vst [vmem:[%s137 + $0x8] sm:$0xff] %v211
        %220 = vst [vmem:[%s137 + $0x10] sm:$0xff] %v212
        %221 = vst [vmem:[%s137 + $0x18] sm:$0xff] %v213
        %222 = vst [vmem:[%s137 + $0x20] sm:$0xff] %v214
        %223 = vst [vmem:[%s137 + $0x28] sm:$0xff] %v215
        %224 = vst [vmem:[%s137 + $0x30] sm:$0xff] %v216
        %225 = vst [vmem:[%s137 + $0x38] sm:$0xff] %v217
        %s226 = sand.u32 %s71, 1
        %s227 = scalar_lea.sflag [#allocation3], %s226
        %s228 = sand.u32 %s71, 1
        %s229 = smul.addr %s228, 64
        %s230 = scalar_lea.vmem [#allocation2], %s229
        // Predicated region
        $region29: #{tpu_custom_call.1} parent=27 // pred_check
          %p231 = pneg %p81
        $region30: #{tpu_custom_call.1} parent=27 // pred_check_branch
          %233 = sbr.rel (%p231) target = $region32
        $region31: #{tpu_custom_call.1} parent=27 // pred_region
          %s234 = smul.u32 8, %s16
          %s236 = ssub.s32 1024, 1024
          %237 = vsyncadd %s227, %s236
          %s238 = smul.addr %s234, 128
          %s239 = scalar_lea.hbm %s2, %s238
          %s240 = sshll.u32 %s230, 4
          %s241 = int_to_ptr.vmem [resolvable:$true] %s240
          %246 = dma.vmem_to_hbm [thread:$0]  %s241, 1024, %s239, %s227, 128, 128, 8
        $region32: #{tpu_custom_call.1} parent=27 // pred_fallthru
          _
      $region28: #{tpu_custom_call.1} parent=5 // pred_fallthru
        _
      %p247 = scmp.le.s32.totalorder 2, %s11
      // Predicated region
      $region33: #{tpu_custom_call.1} parent=5 // pred_check
        %p248 = pneg %p247
      $region34: #{tpu_custom_call.1} parent=5 // pred_check_branch
        %250 = sbr.rel (%p248) target = $region36
      $region35: #{tpu_custom_call.1} parent=5 // pred_region
        %s251 = ssub.s32 %s11, 2
        // Predicated region
        $region37: #{tpu_custom_call.1} parent=35 // pred_check
          %p252 = pneg %p87
        $region38: #{tpu_custom_call.1} parent=35 // pred_check_branch
          %254 = sbr.rel (%p252) target = $region40
        $region39: #{tpu_custom_call.1} parent=35 // pred_region
          %s255 = sand.u32 %s72, 1
          %s256 = scalar_lea.sflag [#allocation3], %s255
          %s257 = sand.u32 %s72, 1
          %s258 = smul.addr %s257, 64
          %s259 = scalar_lea.vmem [#allocation2], %s258
          %260 = dma.done %s256, 1024
        $region40: #{tpu_custom_call.1} parent=35 // pred_fallthru
          _
      $region36: #{tpu_custom_call.1} parent=5 // pred_fallthru
        _
    $region6: #{tpu_custom_call.1} parent=1 // loop_footer
      %s15 = sadd.s32 1, %s11
    $region7: #{tpu_custom_call.1} parent=1 // loop_footer_branch
      %10 = sbr.rel target = $region3
    $region8: #{tpu_custom_call.1} parent=1 // loop_exit
      _
    %261 = vsyncpa [#allocation3], 1
    %s262 = scalar_lea.sflag [#allocation3], 1
    %263 = vsyncpa %s262, 1

</llo_original>
